<compile_context>
chip_gen: v5e
topology: v5e:2x2
jax: 0.10.0
libtpu: 0.0.40
codegen_flags: <defaults>
</compile_context>

<pallas_src>
import functools

import jax
import jax.numpy as jnp
from jax.experimental import pallas as pl
from jax.experimental.pallas import tpu as pltpu


def _time_lstm_seq_kernel(
    # per-step streamed input
    xdo_ref,      # (B, Kin)        [x | delt | 1 | 0-pad]
    # resident inputs (constant index_map -> DMA'd once)
    state0_ref,   # (B, 4H)         [h_shared0 | c_shared0 | h0 | c0]
    W_sh_ref,     # (Kin+2H, 7H)    shared gates + both inner-time projections
    Watt_ref,     # (H, H)          shared-hidden attention
    batt_ref,     # (1, H)
    W_sp_ref,     # (Kin+3H, 5H)    specific gates (h_shared_sig rows merged in)
    # per-step output
    out_ref,      # (B, 4H)         [h_next_shared | c_next_shared | h_next | c_next]
    # scratch
    state_ref,    # VMEM (B, 4H)    carried recurrence state
    *, hidden_length,
):
  H = hidden_length
  sig, tanh = jax.nn.sigmoid, jnp.tanh
  t = pl.program_id(0)

  @pl.when(t == 0)
  def _():
    state_ref[...] = state0_ref[...]

  def mm(a, w):
    return jnp.dot(a, w, preferred_element_type=jnp.float32)

  xdo = xdo_ref[...]
  hs = state_ref[:, 0:H]
  cs = state_ref[:, H:2 * H]
  h = state_ref[:, 2 * H:3 * H]
  c = state_ref[:, 3 * H:4 * H]

  # -------------------- shared LSTM layer: one fused matmul -------------------
  xin_s = jnp.concatenate([xdo, hs, cs], axis=-1)                 # (B, Kin+2H)
  pre_s = mm(xin_s, W_sh_ref[...])                                # (B, 7H)
  # columns [5H:7H) are the delt projections feeding both inner time sigmoids
  time_terms = sig(pre_s[:, 5 * H:7 * H])                         # (B, 2H)

  i_s = sig(pre_s[:, 0:H])
  f_s = sig(pre_s[:, H:2 * H])
  T_s = sig(pre_s[:, 2 * H:3 * H] + time_terms[:, 0:H])
  k_s = tanh(pre_s[:, 3 * H:4 * H])
  o_s = sig(pre_s[:, 4 * H:5 * H])
  c_next_s = i_s * T_s * k_s + f_s * cs
  h_next_s = o_s * tanh(c_next_s)

  # ----------------- attention sigmoid over the shared hidden -----------------
  h_sig = sig(mm(h_next_s, Watt_ref[...]) + batt_ref[...])

  # --------------- specific LSTM layer: single merged matmul (K=128) ----------
  xin_p = jnp.concatenate([xdo, h, c, h_sig], axis=-1)            # (B, Kin+3H)
  pre = mm(xin_p, W_sp_ref[...])                                  # (B, 5H)

  i_ = sig(pre[:, 0:H])
  f_ = sig(pre[:, H:2 * H])
  T_ = sig(pre[:, 2 * H:3 * H] + time_terms[:, H:2 * H])
  k_ = tanh(pre[:, 3 * H:4 * H])
  o_ = sig(pre[:, 4 * H:5 * H])
  c_next = i_ * T_ * k_ + f_ * c
  h_next = o_ * tanh(c_next)

  # lane-dense (B, 4H) = (8, 128) store; same slab carries the recurrence
  new_state = jnp.concatenate([h_next_s, c_next_s, h_next, c_next], axis=-1)
  state_ref[...] = new_state
  out_ref[...] = new_state


def _round_up(n, m):
  return ((n + m - 1) // m) * m


def pack_params(p, I, H, Te):
  """Pack per-gate parameters into fused weights (biases folded as a row)."""
  f32 = jnp.float32
  Kin = _round_up(I + Te + 1, 32)          # streamed slab width (lane-friendly)
  npad = Kin - (I + Te + 1)
  zIH = jnp.zeros((I, H), f32)
  zHH = jnp.zeros((H, H), f32)
  zTH = jnp.zeros((Te, H), f32)
  zbH = jnp.zeros((1, H), f32)
  zpH = jnp.zeros((npad, H), f32)

  def col(wx, wt, b, blocks):
    # row layout: [x | delt | bias(1) | pad | *blocks]
    return jnp.concatenate([wx, wt, b, zpH] + list(blocks), axis=0)

  # shared columns: i, f, T(linear), k, o, inner-time(shared), inner-time(specific)
  W_sh = jnp.concatenate([
      col(p["Wxs"][0], zTH,         p["bxs"][0], (p["Whs"][0], p["Wcs"][0])),
      col(p["Wxs"][1], zTH,         p["bxs"][1], (p["Whs"][1], p["Wcs"][1])),
      col(p["Wxs"][2], zTH,         p["bxs"][2], (zHH,         zHH)),
      col(p["Wxs"][3], zTH,         p["bxs"][3], (p["Whs"][2], zHH)),
      col(p["Wxs"][4], p["Wts"][1], p["bxs"][4], (p["Whs"][3], p["Wcs"][2])),
      col(zIH,         p["Wts"][0], zbH,         (zHH,         zHH)),
      col(zIH,         p["Wt"][0],  zbH,         (zHH,         zHH)),
  ], axis=1)                                                 # (Kin+2H, 7H)

  # specific layer: W*x acts on concat(x, h_shared_sig) -> split its rows
  Wx_x = p["Wx"][:, :I, :]       # (5, I, H)
  Wx_hs = p["Wx"][:, I:, :]      # (5, H, H)
  W_sp = jnp.concatenate([
      col(Wx_x[0], zTH,        p["bx"][0], (p["Wh"][0], p["Wc"][0], Wx_hs[0])),
      col(Wx_x[1], zTH,        p["bx"][1], (p["Wh"][1], p["Wc"][1], Wx_hs[1])),
      col(Wx_x[2], zTH,        p["bx"][2], (zHH,        zHH,        Wx_hs[2])),
      col(Wx_x[3], zTH,        p["bx"][3], (p["Wh"][2], zHH,        Wx_hs[3])),
      col(Wx_x[4], p["Wt"][1], p["bx"][4], (p["Wh"][3], p["Wc"][2], Wx_hs[4])),
  ], axis=1)                                                 # (Kin+3H, 5H)

  return dict(W_sh=W_sh, Watt=p["Watt"], batt=p["batt"], W_sp=W_sp)


@jax.jit
def time_lstm_seq(xs, delts, h_shared0, c_shared0, h0, c0, packed):
  """Run the Time_LSTM_1 cell over T timesteps inside one pallas_call."""
  T, B, I = xs.shape
  H = h_shared0.shape[-1]
  Kin = packed["W_sh"].shape[0] - 2 * H
  npad = Kin - (I + delts.shape[-1] + 1)

  xdo = jnp.concatenate(
      [xs, delts, jnp.ones((T, B, 1), jnp.float32),
       jnp.zeros((T, B, npad), jnp.float32)], axis=-1)        # (T, B, Kin)
  state0 = jnp.concatenate([h_shared0, c_shared0, h0, c0], axis=-1)  # (B, 4H)

  kernel = functools.partial(_time_lstm_seq_kernel, hidden_length=H)

  # advisory cost hint so XLA can schedule/overlap this custom call
  flops = 2 * B * T * ((Kin + 2 * H) * 7 * H + H * H + (Kin + 3 * H) * 5 * H)
  transcendentals = 15 * B * H * T
  bytes_accessed = 4 * (
      (Kin + 2 * H) * 7 * H + H * H + H + (Kin + 3 * H) * 5 * H   # weights (once)
      + B * 4 * H                                                 # initial state
      + T * B * (Kin + 4 * H))                                    # streamed in/out

  out = pl.pallas_call(
      kernel,
      out_shape=jax.ShapeDtypeStruct((T, B, 4 * H), jnp.float32),
      grid_spec=pltpu.PrefetchScalarGridSpec(
          num_scalar_prefetch=0,
          grid=(T,),
          in_specs=[
              pl.BlockSpec((None, B, Kin), lambda t: (t, 0, 0)),    # streamed/step
              pl.BlockSpec((B, 4 * H), lambda t: (0, 0)),           # state0 (resident)
              pl.BlockSpec(packed["W_sh"].shape, lambda t: (0, 0)), # VMEM-resident
              pl.BlockSpec(packed["Watt"].shape, lambda t: (0, 0)),
              pl.BlockSpec(packed["batt"].shape, lambda t: (0, 0)),
              pl.BlockSpec(packed["W_sp"].shape, lambda t: (0, 0)),
          ],
          out_specs=pl.BlockSpec((None, B, 4 * H), lambda t: (t, 0, 0)),
          scratch_shapes=[pltpu.VMEM((B, 4 * H), jnp.float32)],
      ),
      compiler_params=pltpu.CompilerParams(
          dimension_semantics=("arbitrary",)),     # recurrence is sequential
      cost_estimate=pl.CostEstimate(
          flops=flops, transcendentals=transcendentals,
          bytes_accessed=bytes_accessed),
  )(xdo, state0, packed["W_sh"], packed["Watt"], packed["batt"], packed["W_sp"])

  return (out[:, :, 0:H], out[:, :, H:2 * H],
          out[:, :, 2 * H:3 * H], out[:, :, 3 * H:4 * H])


def time_lstm_forward(x, h_shared, c_shared, h, c, delt, packed):
  """Single-step forward matching Time_LSTM_1.forward exactly (T = 1)."""
  outs = time_lstm_seq(x[None], delt[None], h_shared, c_shared, h, c, packed)
  return tuple(o[0] for o in outs)


def init_params(key, I, H, Te):
  """Deterministic PyTorch-nn.Linear-style init (uniform(+-1/sqrt(fan_in)))."""
  keys = iter(jax.random.split(key, 16))

  def lin(fan_in, shape):
    bound = 1.0 / (fan_in ** 0.5)
    return jax.random.uniform(next(keys), shape, jnp.float32, -bound, bound)

  return dict(
      # shared layer
      Wxs=lin(I, (5, I, H)), bxs=lin(I, (5, 1, H)),
      Whs=lin(H, (4, H, H)), Wcs=lin(H, (3, H, H)), Wts=lin(Te, (2, Te, H)),
      # shared-hidden attention
      Watt=lin(H, (H, H)), batt=lin(H, (1, H)),
      # specific layer (input is concat(x, h_shared_sig) -> fan_in = I + H)
      Wx=lin(I + H, (5, I + H, H)), bx=lin(I + H, (5, 1, H)),
      Wh=lin(H, (4, H, H)), Wc=lin(H, (3, H, H)), Wt=lin(Te, (2, Te, H)),
  )


def reference_forward(x, hs, cs, h, c, delt, p):
  """Pure-JAX mirror of the PyTorch forward (single step)."""
  sig, tanh = jax.nn.sigmoid, jnp.tanh
  i_s = sig(x @ p["Wxs"][0] + p["bxs"][0] + hs @ p["Whs"][0] + cs @ p["Wcs"][0])
  f_s = sig(x @ p["Wxs"][1] + p["bxs"][1] + hs @ p["Whs"][1] + cs @ p["Wcs"][1])
  T_s = sig(x @ p["Wxs"][2] + p["bxs"][2] + sig(delt @ p["Wts"][0]))
  k_s = tanh(x @ p["Wxs"][3] + p["bxs"][3] + hs @ p["Whs"][2])
  c_next_s = i_s * T_s * k_s + f_s * cs
  o_s = sig(x @ p["Wxs"][4] + p["bxs"][4] + delt @ p["Wts"][1]
            + hs @ p["Whs"][3] + cs @ p["Wcs"][2])
  h_next_s = o_s * tanh(c_next_s)

  h_sig = sig(h_next_s @ p["Watt"] + p["batt"])
  xc = jnp.concatenate([x, h_sig], axis=1)

  i_ = sig(xc @ p["Wx"][0] + p["bx"][0] + h @ p["Wh"][0] + c @ p["Wc"][0])
  f_ = sig(xc @ p["Wx"][1] + p["bx"][1] + h @ p["Wh"][1] + c @ p["Wc"][1])
  T_ = sig(xc @ p["Wx"][2] + p["bx"][2] + sig(delt @ p["Wt"][0]))
  k_ = tanh(xc @ p["Wx"][3] + p["bx"][3] + h @ p["Wh"][2])
  c_next = i_ * T_ * k_ + f_ * c
  o_ = sig(xc @ p["Wx"][4] + p["bx"][4] + delt @ p["Wt"][1]
           + h @ p["Wh"][3] + c @ p["Wc"][2])
  h_next = o_ * tanh(c_next)
  return h_next_s, c_next_s, h_next, c_next


def reference_forward_seq(xs, delts, hs, cs, h, c, p):
  hs_seq, cs_seq, h_seq, c_seq = [], [], [], []
  for t in range(xs.shape[0]):
    hs, cs, h, c = reference_forward(xs[t], hs, cs, h, c, delts[t], p)
    hs_seq.append(hs); cs_seq.append(cs); h_seq.append(h); c_seq.append(c)
  return (jnp.stack(hs_seq), jnp.stack(cs_seq),
          jnp.stack(h_seq), jnp.stack(c_seq))


if __name__ == "__main__":
  # batch, input_length, hidden_length, TIME_EMBED_SIZE, timesteps
  B, I, H, Te, T = 8, 16, 32, 8, 8

  key = jax.random.PRNGKey(0)
  k_in, k_par = jax.random.split(key)
  kx, khs, kcs, kh, kc, kd = jax.random.split(k_in, 6)

  xs = jax.random.normal(kx, (T, B, I), jnp.float32)
  delts = jax.random.normal(kd, (T, B, Te), jnp.float32)
  h_shared0 = jax.random.normal(khs, (B, H), jnp.float32)
  c_shared0 = jax.random.normal(kcs, (B, H), jnp.float32)
  h0 = jax.random.normal(kh, (B, H), jnp.float32)
  c0 = jax.random.normal(kc, (B, H), jnp.float32)

  params = init_params(k_par, I, H, Te)
  packed = jax.tree_util.tree_map(
      jax.block_until_ready, pack_params(params, I, H, Te))

  # fused T-step recurrence (one pallas_call)
  outs = jax.block_until_ready(
      time_lstm_seq(xs, delts, h_shared0, c_shared0, h0, c0, packed))
  refs = reference_forward_seq(xs, delts, h_shared0, c_shared0, h0, c0, params)

  names = ("h_next_shared", "c_next_shared", "h_next", "c_next")
  for name, o, r in zip(names, outs, refs):
    assert o.shape == (T, B, H) and o.dtype == jnp.float32
    err = float(jnp.max(jnp.abs(o - r)))
    assert err < 1e-4, f"{name} sequence mismatch: max abs err {err}"

  # single-step path (original module forward signature)
  one = jax.block_until_ready(
      time_lstm_forward(xs[0], h_shared0, c_shared0, h0, c0, delts[0], packed))
  for name, o, r in zip(names, one, [r[0] for r in refs]):
    err = float(jnp.max(jnp.abs(o - r)))
    assert err < 1e-4, f"{name} single-step mismatch: max abs err {err}"

  print("KERNEL_OK")
</pallas_src>

<mosaic_0001>
module attributes {stable_mosaic.version = 11 : i64} {
  func.func @_time_lstm_seq_kernel(%arg0: i32, %arg1: memref<1x8x32xf32, #tpu.memory_space<vmem>>, %arg2: memref<8x128xf32, #tpu.memory_space<vmem>>, %arg3: memref<96x224xf32, #tpu.memory_space<vmem>>, %arg4: memref<32x32xf32, #tpu.memory_space<vmem>>, %arg5: memref<1x32xf32, #tpu.memory_space<vmem>>, %arg6: memref<128x160xf32, #tpu.memory_space<vmem>>, %arg7: memref<1x8x128xf32, #tpu.memory_space<vmem>>, %arg8: memref<8x128xf32, #tpu.memory_space<vmem>>) attributes {dimension_semantics = [#tpu.dimension_semantics<arbitrary>], iteration_bounds = array<i64: 8>, scalar_prefetch = 0 : i64, scratch_operands = 1 : i64, tpu.core_type = #tpu.core_type<tc>, window_params = [{transform_indices = @transform_0, window_bounds = array<i64: 1, 8, 32>}, {pipeline_mode = #tpu.pipeline_mode<synchronous>, transform_indices = @transform_1, window_bounds = array<i64: 8, 128>}, {pipeline_mode = #tpu.pipeline_mode<synchronous>, transform_indices = @transform_2, window_bounds = array<i64: 96, 224>}, {pipeline_mode = #tpu.pipeline_mode<synchronous>, transform_indices = @transform_3, window_bounds = array<i64: 32, 32>}, {pipeline_mode = #tpu.pipeline_mode<synchronous>, transform_indices = @transform_4, window_bounds = array<i64: 1, 32>}, {pipeline_mode = #tpu.pipeline_mode<synchronous>, transform_indices = @transform_5, window_bounds = array<i64: 128, 160>}, {transform_indices = @transform_6, window_bounds = array<i64: 1, 8, 128>}]} {
    %c0_i32 = arith.constant 0 : i32
    %0 = arith.cmpi eq, %arg0, %c0_i32 : i32
    %1 = arith.extui %0 : i1 to i32
    %c0_i32_0 = arith.constant 0 : i32
    %2 = arith.cmpi ne, %1, %c0_i32_0 : i32
    scf.if %2 {
      %c0_33 = arith.constant 0 : index
      %c0_34 = arith.constant 0 : index
      %104 = vector.load %arg2[%c0_33, %c0_34] : memref<8x128xf32, #tpu.memory_space<vmem>>, vector<8x128xf32>
      %c0_35 = arith.constant 0 : index
      %c0_36 = arith.constant 0 : index
      %105 = vector.load %arg8[%c0_35, %c0_36] : memref<8x128xf32, #tpu.memory_space<vmem>>, vector<8x128xf32>
      tpu.vector_store %arg8[%c0_35, %c0_36], %104 {strides = array<i32>} : memref<8x128xf32, #tpu.memory_space<vmem>>, vector<8x128xf32>,
    } else {
    }
    %c0 = arith.constant 0 : index
    %c0_1 = arith.constant 0 : index
    %c0_2 = arith.constant 0 : index
    %3 = vector.load %arg1[%c0, %c0_1, %c0_2] : memref<1x8x32xf32, #tpu.memory_space<vmem>>, vector<1x8x32xf32>
    %4 = vector.shape_cast %3 : vector<1x8x32xf32> to vector<8x32xf32>
    %c0_3 = arith.constant 0 : index
    %c0_4 = arith.constant 0 : index
    %5 = vector.load %arg8[%c0_3, %c0_4] : memref<8x128xf32, #tpu.memory_space<vmem>>, vector<8x32xf32>
    %c0_5 = arith.constant 0 : index
    %c32 = arith.constant 32 : index
    %6 = vector.load %arg8[%c0_5, %c32] : memref<8x128xf32, #tpu.memory_space<vmem>>, vector<8x32xf32>
    %c0_6 = arith.constant 0 : index
    %c64 = arith.constant 64 : index
    %7 = vector.load %arg8[%c0_6, %c64] : memref<8x128xf32, #tpu.memory_space<vmem>>, vector<8x32xf32>
    %c0_7 = arith.constant 0 : index
    %c96 = arith.constant 96 : index
    %8 = vector.load %arg8[%c0_7, %c96] : memref<8x128xf32, #tpu.memory_space<vmem>>, vector<8x32xf32>
    %9 = tpu.concatenate %4, %5, %6 in 1 : vector<8x32xf32>, vector<8x32xf32>, vector<8x32xf32> -> vector<8x96xf32>
    %c0_8 = arith.constant 0 : index
    %c0_9 = arith.constant 0 : index
    %10 = vector.load %arg3[%c0_8, %c0_9] : memref<96x224xf32, #tpu.memory_space<vmem>>, vector<96x224xf32>
    %cst = arith.constant dense<0.000000e+00> : vector<8x224xf32>
    %11 = tpu.matmul %9, %10, %cst {dimension_numbers = #tpu.dot_dimension_numbers<[1], [0], [0], [1], [0, 0, 1, 1], [], []>} : vector<8x96xf32>, vector<96x224xf32>, vector<8x224xf32> -> vector<8x224xf32>
    %12 = vector.extract_strided_slice %11 {offsets = [0, 160], sizes = [8, 64], strides = [1, 1]} : vector<8x224xf32> to vector<8x64xf32>
    %13 = arith.negf %12 : vector<8x64xf32>
    %14 = math.exp %13 : vector<8x64xf32>
    %cst_10 = arith.constant 1.000000e+00 : f32
    %15 = vector.broadcast %cst_10 : f32 to vector<8x64xf32>
    %16 = arith.addf %15, %14 : vector<8x64xf32>
    %17 = arith.divf %15, %16 : vector<8x64xf32>
    %18 = vector.extract_strided_slice %11 {offsets = [0, 0], sizes = [8, 32], strides = [1, 1]} : vector<8x224xf32> to vector<8x32xf32>
    %19 = arith.negf %18 : vector<8x32xf32>
    %20 = math.exp %19 : vector<8x32xf32>
    %cst_11 = arith.constant 1.000000e+00 : f32
    %21 = vector.broadcast %cst_11 : f32 to vector<8x32xf32>
    %22 = arith.addf %21, %20 : vector<8x32xf32>
    %23 = arith.divf %21, %22 : vector<8x32xf32>
    %24 = vector.extract_strided_slice %11 {offsets = [0, 32], sizes = [8, 32], strides = [1, 1]} : vector<8x224xf32> to vector<8x32xf32>
    %25 = arith.negf %24 : vector<8x32xf32>
    %26 = math.exp %25 : vector<8x32xf32>
    %cst_12 = arith.constant 1.000000e+00 : f32
    %27 = vector.broadcast %cst_12 : f32 to vector<8x32xf32>
    %28 = arith.addf %27, %26 : vector<8x32xf32>
    %29 = arith.divf %27, %28 : vector<8x32xf32>
    %30 = vector.extract_strided_slice %11 {offsets = [0, 64], sizes = [8, 32], strides = [1, 1]} : vector<8x224xf32> to vector<8x32xf32>
    %31 = vector.extract_strided_slice %17 {offsets = [0, 0], sizes = [8, 32], strides = [1, 1]} : vector<8x64xf32> to vector<8x32xf32>
    %32 = arith.addf %30, %31 : vector<8x32xf32>
    %33 = arith.negf %32 : vector<8x32xf32>
    %34 = math.exp %33 : vector<8x32xf32>
    %cst_13 = arith.constant 1.000000e+00 : f32
    %35 = vector.broadcast %cst_13 : f32 to vector<8x32xf32>
    %36 = arith.addf %35, %34 : vector<8x32xf32>
    %37 = arith.divf %35, %36 : vector<8x32xf32>
    %38 = vector.extract_strided_slice %11 {offsets = [0, 96], sizes = [8, 32], strides = [1, 1]} : vector<8x224xf32> to vector<8x32xf32>
    %39 = math.tanh %38 : vector<8x32xf32>
    %40 = vector.extract_strided_slice %11 {offsets = [0, 128], sizes = [8, 32], strides = [1, 1]} : vector<8x224xf32> to vector<8x32xf32>
    %41 = arith.negf %40 : vector<8x32xf32>
    %42 = math.exp %41 : vector<8x32xf32>
    %cst_14 = arith.constant 1.000000e+00 : f32
    %43 = vector.broadcast %cst_14 : f32 to vector<8x32xf32>
    %44 = arith.addf %43, %42 : vector<8x32xf32>
    %45 = arith.divf %43, %44 : vector<8x32xf32>
    %46 = arith.mulf %23, %37 : vector<8x32xf32>
    %47 = arith.mulf %46, %39 : vector<8x32xf32>
    %48 = arith.mulf %29, %6 : vector<8x32xf32>
    %49 = arith.addf %47, %48 : vector<8x32xf32>
    %50 = math.tanh %49 : vector<8x32xf32>
    %51 = arith.mulf %45, %50 : vector<8x32xf32>
    %c0_15 = arith.constant 0 : index
    %c0_16 = arith.constant 0 : index
    %52 = vector.load %arg4[%c0_15, %c0_16] : memref<32x32xf32, #tpu.memory_space<vmem>>, vector<32x32xf32>
    %cst_17 = arith.constant dense<0.000000e+00> : vector<8x32xf32>
    %53 = tpu.matmul %51, %52, %cst_17 {dimension_numbers = #tpu.dot_dimension_numbers<[1], [0], [0], [1], [0, 0, 1, 1], [], []>} : vector<8x32xf32>, vector<32x32xf32>, vector<8x32xf32> -> vector<8x32xf32>
    %c0_18 = arith.constant 0 : index
    %c0_19 = arith.constant 0 : index
    %54 = vector.load %arg5[%c0_18, %c0_19] : memref<1x32xf32, #tpu.memory_space<vmem>>, vector<1x32xf32>
    %55 = vector.broadcast %54 : vector<1x32xf32> to vector<8x32xf32>
    %56 = arith.addf %53, %55 : vector<8x32xf32>
    %57 = arith.negf %56 : vector<8x32xf32>
    %58 = math.exp %57 : vector<8x32xf32>
    %cst_20 = arith.constant 1.000000e+00 : f32
    %59 = vector.broadcast %cst_20 : f32 to vector<8x32xf32>
    %60 = arith.addf %59, %58 : vector<8x32xf32>
    %61 = arith.divf %59, %60 : vector<8x32xf32>
    %62 = tpu.concatenate %4, %7, %8, %61 in 1 : vector<8x32xf32>, vector<8x32xf32>, vector<8x32xf32>, vector<8x32xf32> -> vector<8x128xf32>
    %c0_21 = arith.constant 0 : index
    %c0_22 = arith.constant 0 : index
    %63 = vector.load %arg6[%c0_21, %c0_22] : memref<128x160xf32, #tpu.memory_space<vmem>>, vector<128x160xf32>
    %cst_23 = arith.constant dense<0.000000e+00> : vector<8x160xf32>
    %64 = tpu.matmul %62, %63, %cst_23 {dimension_numbers = #tpu.dot_dimension_numbers<[1], [0], [0], [1], [0, 0, 1, 1], [], []>} : vector<8x128xf32>, vector<128x160xf32>, vector<8x160xf32> -> vector<8x160xf32>
    %65 = vector.extract_strided_slice %64 {offsets = [0, 0], sizes = [8, 32], strides = [1, 1]} : vector<8x160xf32> to vector<8x32xf32>
    %66 = arith.negf %65 : vector<8x32xf32>
    %67 = math.exp %66 : vector<8x32xf32>
    %cst_24 = arith.constant 1.000000e+00 : f32
    %68 = vector.broadcast %cst_24 : f32 to vector<8x32xf32>
    %69 = arith.addf %68, %67 : vector<8x32xf32>
    %70 = arith.divf %68, %69 : vector<8x32xf32>
    %71 = vector.extract_strided_slice %64 {offsets = [0, 32], sizes = [8, 32], strides = [1, 1]} : vector<8x160xf32> to vector<8x32xf32>
    %72 = arith.negf %71 : vector<8x32xf32>
    %73 = math.exp %72 : vector<8x32xf32>
    %cst_25 = arith.constant 1.000000e+00 : f32
    %74 = vector.broadcast %cst_25 : f32 to vector<8x32xf32>
    %75 = arith.addf %74, %73 : vector<8x32xf32>
    %76 = arith.divf %74, %75 : vector<8x32xf32>
    %77 = vector.extract_strided_slice %64 {offsets = [0, 64], sizes = [8, 32], strides = [1, 1]} : vector<8x160xf32> to vector<8x32xf32>
    %78 = vector.extract_strided_slice %17 {offsets = [0, 32], sizes = [8, 32], strides = [1, 1]} : vector<8x64xf32> to vector<8x32xf32>
    %79 = arith.addf %77, %78 : vector<8x32xf32>
    %80 = arith.negf %79 : vector<8x32xf32>
    %81 = math.exp %80 : vector<8x32xf32>
    %cst_26 = arith.constant 1.000000e+00 : f32
    %82 = vector.broadcast %cst_26 : f32 to vector<8x32xf32>
    %83 = arith.addf %82, %81 : vector<8x32xf32>
    %84 = arith.divf %82, %83 : vector<8x32xf32>
    %85 = vector.extract_strided_slice %64 {offsets = [0, 96], sizes = [8, 32], strides = [1, 1]} : vector<8x160xf32> to vector<8x32xf32>
    %86 = math.tanh %85 : vector<8x32xf32>
    %87 = vector.extract_strided_slice %64 {offsets = [0, 128], sizes = [8, 32], strides = [1, 1]} : vector<8x160xf32> to vector<8x32xf32>
    %88 = arith.negf %87 : vector<8x32xf32>
    %89 = math.exp %88 : vector<8x32xf32>
    %cst_27 = arith.constant 1.000000e+00 : f32
    %90 = vector.broadcast %cst_27 : f32 to vector<8x32xf32>
    %91 = arith.addf %90, %89 : vector<8x32xf32>
    %92 = arith.divf %90, %91 : vector<8x32xf32>
    %93 = arith.mulf %70, %84 : vector<8x32xf32>
    %94 = arith.mulf %93, %86 : vector<8x32xf32>
    %95 = arith.mulf %76, %8 : vector<8x32xf32>
    %96 = arith.addf %94, %95 : vector<8x32xf32>
    %97 = math.tanh %96 : vector<8x32xf32>
    %98 = arith.mulf %92, %97 : vector<8x32xf32>
    %99 = tpu.concatenate %51, %49, %98, %96 in 1 : vector<8x32xf32>, vector<8x32xf32>, vector<8x32xf32>, vector<8x32xf32> -> vector<8x128xf32>
    %c0_28 = arith.constant 0 : index
    %c0_29 = arith.constant 0 : index
    %100 = vector.load %arg8[%c0_28, %c0_29] : memref<8x128xf32, #tpu.memory_space<vmem>>, vector<8x128xf32>
    tpu.vector_store %arg8[%c0_28, %c0_29], %99 {strides = array<i32>} : memref<8x128xf32, #tpu.memory_space<vmem>>, vector<8x128xf32>,
    %c0_30 = arith.constant 0 : index
    %c0_31 = arith.constant 0 : index
    %c0_32 = arith.constant 0 : index
    %101 = vector.load %arg7[%c0_30, %c0_31, %c0_32] : memref<1x8x128xf32, #tpu.memory_space<vmem>>, vector<1x8x128xf32>
    %102 = vector.shape_cast %101 : vector<1x8x128xf32> to vector<8x128xf32>
    %103 = vector.shape_cast %99 : vector<8x128xf32> to vector<1x8x128xf32>
    tpu.vector_store %arg7[%c0_30, %c0_31, %c0_32], %103 {strides = array<i32>} : memref<1x8x128xf32, #tpu.memory_space<vmem>>, vector<1x8x128xf32>,
    return
  }
  func.func @transform_0(%arg0: i32) -> (i32, i32, i32) {
    %c0_i32 = arith.constant 0 : i32
    %c0_i32_0 = arith.constant 0 : i32
    %c0_i32_1 = arith.constant 0 : i32
    return %arg0, %c0_i32, %c0_i32_0 : i32, i32, i32
  }
  func.func @transform_1(%arg0: i32) -> (i32, i32) {
    %c0_i32 = arith.constant 0 : i32
    %c0_i32_0 = arith.constant 0 : i32
    %c0_i32_1 = arith.constant 0 : i32
    return %c0_i32, %c0_i32_0 : i32, i32
  }
  func.func @transform_2(%arg0: i32) -> (i32, i32) {
    %c0_i32 = arith.constant 0 : i32
    %c0_i32_0 = arith.constant 0 : i32
    %c0_i32_1 = arith.constant 0 : i32
    return %c0_i32, %c0_i32_0 : i32, i32
  }
  func.func @transform_3(%arg0: i32) -> (i32, i32) {
    %c0_i32 = arith.constant 0 : i32
    %c0_i32_0 = arith.constant 0 : i32
    %c0_i32_1 = arith.constant 0 : i32
    return %c0_i32, %c0_i32_0 : i32, i32
  }
  func.func @transform_4(%arg0: i32) -> (i32, i32) {
    %c0_i32 = arith.constant 0 : i32
    %c0_i32_0 = arith.constant 0 : i32
    %c0_i32_1 = arith.constant 0 : i32
    return %c0_i32, %c0_i32_0 : i32, i32
  }
  func.func @transform_5(%arg0: i32) -> (i32, i32) {
    %c0_i32 = arith.constant 0 : i32
    %c0_i32_0 = arith.constant 0 : i32
    %c0_i32_1 = arith.constant 0 : i32
    return %c0_i32, %c0_i32_0 : i32, i32
  }
  func.func @transform_6(%arg0: i32) -> (i32, i32, i32) {
    %c0_i32 = arith.constant 0 : i32
    %c0_i32_0 = arith.constant 0 : i32
    %c0_i32_1 = arith.constant 0 : i32
    return %arg0, %c0_i32, %c0_i32_0 : i32, i32, i32
  }
}

</mosaic_0001>

<llo_original>
// kernel: time_lstm_seq.1
$region0: #{time_lstm_seq.1}
  #allocation0 [shape = 'u32[]', space=smem, size = 0x4, offset = 0x4, fixed_abs, tag = 'smem constant byte address 0x4 - core index']
  #allocation1 [shape = 'u32[72,128]{1,0:T(1,128)}', space=vmem, size = 0x9000, scoped, tag = 'internal scratch']
  #allocation2 [shape = 'f32[8,128]{1,0:T(8,128)}', space=vmem, size = 0x1000, scoped, tag = 'scratch operand']
  %s0 = inlined_call_operand.vmem [shape: f32[8,8,32], index: 0, kind: input, shape index: {}]
  %s1 = inlined_call_operand.vmem [shape: f32[8,128], index: 1, kind: input, shape index: {}]
  %s2 = inlined_call_operand.vmem [shape: f32[96,224], index: 2, kind: input, shape index: {}]
  %s3 = inlined_call_operand.vmem [shape: f32[32,32], index: 3, kind: input, shape index: {}]
  %s4 = inlined_call_operand.vmem [shape: f32[1,32], index: 4, kind: input, shape index: {}]
  %s5 = inlined_call_operand.vmem [shape: f32[128,160], index: 5, kind: input, shape index: {}]
  %s6 = inlined_call_operand.vmem [shape: f32[8,8,128], index: 6, kind: output, shape index: {}]
  %s7 = sld [smem:[#allocation0]]
  $region61: #{time_lstm_seq.1} parent=0
    _
  %s9 = ssub.s32 1, %s7
  %s10 = scalar_select 0, %s9, %s7
  loop: start=0, step=1, limit=10
  $region2: #{time_lstm_seq.1} parent=0 // loop_pre_header
    _
  $region3: #{time_lstm_seq.1} parent=0 // loop_header
    %s12 = sphi 0, %s16
    %p13 = scmp.ge.s32.totalorder %s12, 10
    %s22 = sphi 0, %s24
    %s25 = sphi 0, %s22
    %s26 = sphi 0, %s25
    %s42 = sphi 0, %s26
    %s46 = sphi 0, %s46
    %s48 = sphi 0, %s46
    %s49 = sphi 0, %s48
    %s63 = sphi 0, %s49
    %s67 = sphi 0, %s67
    %s69 = sphi 0, %s67
    %s70 = sphi 0, %s69
    %s84 = sphi 0, %s70
    %s88 = sphi 0, %s88
    %s90 = sphi 0, %s88
    %s91 = sphi 0, %s90
    %s105 = sphi 0, %s91
    %s109 = sphi 0, %s109
    %s111 = sphi 0, %s109
    %s112 = sphi 0, %s111
    %s126 = sphi 0, %s112
    %s130 = sphi 0, %s130
    %s132 = sphi 0, %s130
    %s133 = sphi 0, %s132
    %s147 = sphi 0, %s133
    %s153 = sphi 0, %s155
    %s156 = sphi 0, %s153
    %s157 = sphi 0, %s156
    %s173 = sphi 0, %s157
  $region4: #{time_lstm_seq.1} parent=0 // loop_header_branch
    %15 = sbr.rel (%p13) target = $region8
  $region5: #{time_lstm_seq.1} parent=0 // loop_body
    %s17 = ssub.s32 %s12, 1
    %s18 = ssub.s32 %s12, 2
    %s19 = sadd.s32 %s12, 1
    %s20 = ssub.s32 %s12, %s19
    %p21 = scmp.eq.s32.totalorder %s20, 0
    %s23 = sadd.s32 %s22, 1
    %s24 = scalar_select %p21, %s22, %s23
    %p27 = pneg %p21
    %p28 = scmp.eq.s32.totalorder %s12, 7
    %p29 = por %p27, %p28
    %p30 = scmp.ne.s32.totalorder %s22, %s25
    %p31 = scmp.eq.s32.totalorder %s12, 0
    %p32 = por %p30, %p31
    %p33 = scmp.ne.s32.totalorder %s22, %s25
    %p34 = scmp.eq.s32.totalorder %s17, 7
    %p35 = por %p33, %p34
    %p36 = scmp.ne.s32.totalorder %s25, %s26
    %p37 = scmp.eq.s32.totalorder %s17, 0
    %p38 = por %p36, %p37
    %p39 = scmp.ne.s32.totalorder %s25, %s26
    %p40 = scmp.eq.s32.totalorder %s18, 7
    %p41 = por %p39, %p40
    %p43 = scmp.ne.s32.totalorder %s26, %s42
    %p44 = scmp.eq.s32.totalorder %s18, 0
    %p45 = por %p43, %p44
    %s47 = sadd.s32 %s46, 1
    %p50 = scmp.eq.s32.totalorder %s12, 7
    %p51 = scmp.ne.s32.totalorder %s46, %s48
    %p52 = scmp.eq.s32.totalorder %s12, 0
    %p53 = por %p51, %p52
    %p54 = scmp.ne.s32.totalorder %s46, %s48
    %p55 = scmp.eq.s32.totalorder %s17, 7
    %p56 = por %p54, %p55
    %p57 = scmp.ne.s32.totalorder %s48, %s49
    %p58 = scmp.eq.s32.totalorder %s17, 0
    %p59 = por %p57, %p58
    %p60 = scmp.ne.s32.totalorder %s48, %s49
    %p61 = scmp.eq.s32.totalorder %s18, 7
    %p62 = por %p60, %p61
    %p64 = scmp.ne.s32.totalorder %s49, %s63
    %p65 = scmp.eq.s32.totalorder %s18, 0
    %p66 = por %p64, %p65
    %s68 = sadd.s32 %s67, 1
    %p71 = scmp.eq.s32.totalorder %s12, 7
    %p72 = scmp.ne.s32.totalorder %s67, %s69
    %p73 = scmp.eq.s32.totalorder %s12, 0
    %p74 = por %p72, %p73
    %p75 = scmp.ne.s32.totalorder %s67, %s69
    %p76 = scmp.eq.s32.totalorder %s17, 7
    %p77 = por %p75, %p76
    %p78 = scmp.ne.s32.totalorder %s69, %s70
    %p79 = scmp.eq.s32.totalorder %s17, 0
    %p80 = por %p78, %p79
    %p81 = scmp.ne.s32.totalorder %s69, %s70
    %p82 = scmp.eq.s32.totalorder %s18, 7
    %p83 = por %p81, %p82
    %p85 = scmp.ne.s32.totalorder %s70, %s84
    %p86 = scmp.eq.s32.totalorder %s18, 0
    %p87 = por %p85, %p86
    %s89 = sadd.s32 %s88, 1
    %p92 = scmp.eq.s32.totalorder %s12, 7
    %p93 = scmp.ne.s32.totalorder %s88, %s90
    %p94 = scmp.eq.s32.totalorder %s12, 0
    %p95 = por %p93, %p94
    %p96 = scmp.ne.s32.totalorder %s88, %s90
    %p97 = scmp.eq.s32.totalorder %s17, 7
    %p98 = por %p96, %p97
    %p99 = scmp.ne.s32.totalorder %s90, %s91
    %p100 = scmp.eq.s32.totalorder %s17, 0
    %p101 = por %p99, %p100
    %p102 = scmp.ne.s32.totalorder %s90, %s91
    %p103 = scmp.eq.s32.totalorder %s18, 7
    %p104 = por %p102, %p103
    %p106 = scmp.ne.s32.totalorder %s91, %s105
    %p107 = scmp.eq.s32.totalorder %s18, 0
    %p108 = por %p106, %p107
    %s110 = sadd.s32 %s109, 1
    %p113 = scmp.eq.s32.totalorder %s12, 7
    %p114 = scmp.ne.s32.totalorder %s109, %s111
    %p115 = scmp.eq.s32.totalorder %s12, 0
    %p116 = por %p114, %p115
    %p117 = scmp.ne.s32.totalorder %s109, %s111
    %p118 = scmp.eq.s32.totalorder %s17, 7
    %p119 = por %p117, %p118
    %p120 = scmp.ne.s32.totalorder %s111, %s112
    %p121 = scmp.eq.s32.totalorder %s17, 0
    %p122 = por %p120, %p121
    %p123 = scmp.ne.s32.totalorder %s111, %s112
    %p124 = scmp.eq.s32.totalorder %s18, 7
    %p125 = por %p123, %p124
    %p127 = scmp.ne.s32.totalorder %s112, %s126
    %p128 = scmp.eq.s32.totalorder %s18, 0
    %p129 = por %p127, %p128
    %s131 = sadd.s32 %s130, 1
    %p134 = scmp.eq.s32.totalorder %s12, 7
    %p135 = scmp.ne.s32.totalorder %s130, %s132
    %p136 = scmp.eq.s32.totalorder %s12, 0
    %p137 = por %p135, %p136
    %p138 = scmp.ne.s32.totalorder %s130, %s132
    %p139 = scmp.eq.s32.totalorder %s17, 7
    %p140 = por %p138, %p139
    %p141 = scmp.ne.s32.totalorder %s132, %s133
    %p142 = scmp.eq.s32.totalorder %s17, 0
    %p143 = por %p141, %p142
    %p144 = scmp.ne.s32.totalorder %s132, %s133
    %p145 = scmp.eq.s32.totalorder %s18, 7
    %p146 = por %p144, %p145
    %p148 = scmp.ne.s32.totalorder %s133, %s147
    %p149 = scmp.eq.s32.totalorder %s18, 0
    %p150 = por %p148, %p149
    %s151 = ssub.s32 %s12, %s19
    %p152 = scmp.eq.s32.totalorder %s151, 0
    %s154 = sadd.s32 %s153, 1
    %s155 = scalar_select %p152, %s153, %s154
    %p158 = pneg %p152
    %p159 = scmp.eq.s32.totalorder %s12, 7
    %p160 = por %p158, %p159
    %p161 = scmp.ne.s32.totalorder %s153, %s156
    %p162 = scmp.eq.s32.totalorder %s12, 0
    %p163 = por %p161, %p162
    %p164 = scmp.ne.s32.totalorder %s153, %s156
    %p165 = scmp.eq.s32.totalorder %s17, 7
    %p166 = por %p164, %p165
    %p167 = scmp.ne.s32.totalorder %s156, %s157
    %p168 = scmp.eq.s32.totalorder %s17, 0
    %p169 = por %p167, %p168
    %p170 = scmp.ne.s32.totalorder %s156, %s157
    %p171 = scmp.eq.s32.totalorder %s18, 7
    %p172 = por %p170, %p171
    %p174 = scmp.ne.s32.totalorder %s157, %s173
    %p175 = scmp.eq.s32.totalorder %s18, 0
    %p176 = por %p174, %p175
    %p177 = scmp.le.s32.totalorder 1, %s12
    %p178 = scmp.lt.s32.totalorder %s12, 9
    %p179 = pnand %p177, %p178
    %p180 = pneg %p179
    // Predicated region
    $region9: #{time_lstm_seq.1} parent=5 // pred_check
      _
    $region10: #{time_lstm_seq.1} parent=5 // pred_check_branch
      %182 = sbr.rel (%p179) target = $region12
    $region11: #{time_lstm_seq.1} parent=5 // pred_region
      %s183 = ssub.s32 %s12, 1
      // Predicated region
      $region13: #{time_lstm_seq.1} parent=11 // pred_check
        %p184 = pneg %p59
      $region14: #{time_lstm_seq.1} parent=11 // pred_check_branch
        %186 = sbr.rel (%p184) target = $region16
      $region15: #{time_lstm_seq.1} parent=11 // pred_region
        _
      $region16: #{time_lstm_seq.1} parent=11 // pred_fallthru
        _
      // Predicated region
      $region17: #{time_lstm_seq.1} parent=11 // pred_check
        %p187 = pneg %p80
      $region18: #{time_lstm_seq.1} parent=11 // pred_check_branch
        %189 = sbr.rel (%p187) target = $region20
      $region19: #{time_lstm_seq.1} parent=11 // pred_region
        _
      $region20: #{time_lstm_seq.1} parent=11 // pred_fallthru
        _
      // Predicated region
      $region21: #{time_lstm_seq.1} parent=11 // pred_check
        %p190 = pneg %p101
      $region22: #{time_lstm_seq.1} parent=11 // pred_check_branch
        %192 = sbr.rel (%p190) target = $region24
      $region23: #{time_lstm_seq.1} parent=11 // pred_region
        _
      $region24: #{time_lstm_seq.1} parent=11 // pred_fallthru
        _
      // Predicated region
      $region25: #{time_lstm_seq.1} parent=11 // pred_check
        %p193 = pneg %p122
      $region26: #{time_lstm_seq.1} parent=11 // pred_check_branch
        %195 = sbr.rel (%p193) target = $region28
      $region27: #{time_lstm_seq.1} parent=11 // pred_region
        _
      $region28: #{time_lstm_seq.1} parent=11 // pred_fallthru
        _
      // Predicated region
      $region29: #{time_lstm_seq.1} parent=11 // pred_check
        %p196 = pneg %p143
      $region30: #{time_lstm_seq.1} parent=11 // pred_check_branch
        %198 = sbr.rel (%p196) target = $region32
      $region31: #{time_lstm_seq.1} parent=11 // pred_region
        _
      $region32: #{time_lstm_seq.1} parent=11 // pred_fallthru
        _
    $region12: #{time_lstm_seq.1} parent=5 // pred_fallthru
      _
    %p199 = scmp.lt.s32.totalorder %s12, 8
    // Predicated region
    $region33: #{time_lstm_seq.1} parent=5 // pred_check
      %p200 = pneg %p199
    $region34: #{time_lstm_seq.1} parent=5 // pred_check_branch
      %202 = sbr.rel (%p200) target = $region36
    $region35: #{time_lstm_seq.1} parent=5 // pred_region
      // Predicated region
      $region37: #{time_lstm_seq.1} parent=35 // pred_check
        %p203 = pneg %p32
      $region38: #{time_lstm_seq.1} parent=35 // pred_check_branch
        %205 = sbr.rel (%p203) target = $region40
      $region39: #{time_lstm_seq.1} parent=35 // pred_region
        %p206 = scmp.lt.s32.totalorder %s12, 7
        %s207 = scalar_select %p206, %s12, 7
        %s208 = smul.addr %s207, 8
        %s209 = scalar_lea.vmem %s0, %s208
      $region40: #{time_lstm_seq.1} parent=35 // pred_fallthru
        _
    $region36: #{time_lstm_seq.1} parent=5 // pred_fallthru
      _
    %p210 = scmp.le.s32.totalorder 1, %s12
    %p211 = scmp.lt.s32.totalorder %s12, 9
    %p212 = pnand %p210, %p211
    %p213 = pneg %p212
    // Predicated region
    $region41: #{time_lstm_seq.1} parent=5 // pred_check
      _
    $region42: #{time_lstm_seq.1} parent=5 // pred_check_branch
      %215 = sbr.rel (%p212) target = $region44
    $region43: #{time_lstm_seq.1} parent=5 // pred_region
      %s216 = ssub.s32 %s12, 1
      %p217 = scmp.lt.s32.totalorder %s17, 7
      %s218 = scalar_select %p217, %s17, 7
      %s219 = smul.addr %s218, 8
      %s220 = scalar_lea.vmem %s0, %s219
      %p221 = pneg %p38
      %p222 = pneg %p35
      %p223 = pneg %p59
      %p224 = pneg %p56
      %p225 = pneg %p80
      %p226 = pneg %p77
      %p227 = pneg %p101
      %p228 = pneg %p98
      %p229 = pneg %p122
      %p230 = pneg %p119
      %p231 = pneg %p143
      %p232 = pneg %p140
      %p233 = pneg %p169
      %p234 = pneg %p166
      %p235 = scmp.lt.s32.totalorder %s17, 7
      %s236 = scalar_select %p235, %s17, 7
      %s237 = smul.addr %s236, 8
      %s238 = scalar_lea.vmem %s6, %s237
      %p239 = scmp.lt.s32.totalorder %s17, 7
      %s240 = scalar_select %p239, %s17, 7
      %s241 = smul.addr %s240, 8
      %s242 = scalar_lea.vmem %s0, %s241
      %p243 = scmp.lt.s32.totalorder %s17, 7
      %s244 = scalar_select %p243, %s17, 7
      %s245 = smul.addr %s244, 8
      %s246 = scalar_lea.vmem %s6, %s245
      %p247 = scmp.eq.s32.totalorder %s17, 0
      // Predicated region
      $region45: #{time_lstm_seq.1} parent=43 // pred_check
        %p248 = pneg %p247
      $region46: #{time_lstm_seq.1} parent=43 // pred_check_branch
        %250 = sbr.rel (%p248) target = $region48
      $region47: #{time_lstm_seq.1} parent=43 // pred_region
        %v251 = vld [vmem:[%s1] sm:$0xff]
        %252 = vst [vmem:[#allocation2] sm:$0xff] %v251
      $region48: #{time_lstm_seq.1} parent=43 // pred_fallthru
        _
      %v253 = vld [vmem:[%s242] sm:$0xff]
      %v254 = vld [vmem:[#allocation2] sm:$0xff]
      %256 = vrot.lane.b32.xlu0 %v254, 32
      %v257 = vpop.permute.xlu0 %256
      %vm259 = vcmask 261120
      %v260 = vsel %vm259, %v253, %v257
      %vm261 = vcmask 523264
      %v262 = vsel %vm261, %v260, %v257
      %v263 = vld [vmem:[%s2] sm:$0xff]
      %v264 = vld [vmem:[%s2 + $0x8] sm:$0xff]
      %v265 = vld [vmem:[%s2 + $0x10] sm:$0xff]
      %v266 = vld [vmem:[%s2 + $0x18] sm:$0xff]
      %v267 = vld [vmem:[%s2 + $0x20] sm:$0xff]
      %v268 = vld [vmem:[%s2 + $0x28] sm:$0xff]
      %v269 = vld [vmem:[%s2 + $0x30] sm:$0xff]
      %v270 = vld [vmem:[%s2 + $0x38] sm:$0xff]
      %v271 = vld [vmem:[%s2 + $0x40] sm:$0xff]
      %v272 = vld [vmem:[%s2 + $0x48] sm:$0xff]
      %v273 = vld [vmem:[%s2 + $0x50] sm:$0xff]
      %v274 = vld [vmem:[%s2 + $0x58] sm:$0xff]
      %v275 = vld [vmem:[%s2 + $0x60] sm:$0xff]
      %v276 = vld [vmem:[%s2 + $0x68] sm:$0xff]
      %v277 = vld [vmem:[%s2 + $0x70] sm:$0xff]
      %v278 = vld [vmem:[%s2 + $0x78] sm:$0xff]
      %v279 = vld [vmem:[%s2 + $0x80] sm:$0xff]
      %v280 = vld [vmem:[%s2 + $0x88] sm:$0xff]
      %v281 = vld [vmem:[%s2 + $0x90] sm:$0xff]
      %v282 = vld [vmem:[%s2 + $0x98] sm:$0xff]
      %v283 = vld [vmem:[%s2 + $0xa0] sm:$0xff]
      %v284 = vld [vmem:[%s2 + $0xa8] sm:$0xff]
      %v285 = vld [vmem:[%s2 + $0xb0] sm:$0xff]
      %v286 = vld [vmem:[%s2 + $0xb8] sm:$0xff]
      %vm287 = vcmask 785408
      %v289 = vsel %vm287, %v262, 0
      %291 = vmatpush.msra.mxu0 0.0
      %292 = vmatpush.msra.mxu0 0.0
      %293 = vmatpush.msra.mxu0 0.0
      %294 = vmatpush.msra.mxu0 0.0
      %295 = vmatpush.msra.mxu0 %v285
      %296 = vmatpush.msra.mxu0 %v283
      %297 = vmatpush.msra.mxu0 %v281
      %298 = vmatpush.msra.mxu0 %v279
      %299 = vmatpush.msra.mxu0 %v277
      %300 = vmatpush.msra.mxu0 %v275
      %301 = vmatpush.msra.mxu0 %v273
      %302 = vmatpush.msra.mxu0 %v271
      %303 = vmatpush.msra.mxu0 %v269
      %304 = vmatpush.msra.mxu0 %v267
      %305 = vmatpush.msra.mxu0 %v265
      %306 = vmatpush.msra.mxu0 %v263
      %307 = vmatmul.f32.gmra.mxu0 %v289
      %v308 = vpop.f32.mrf.mxu0
      %v309 = vadd.f32 0.0, %v308
      %310 = vdwg.mxu0
      %311 = vmatpush.msra.mxu0 0.0
      %312 = vmatpush.msra.mxu0 0.0
      %313 = vmatpush.msra.mxu0 0.0
      %314 = vmatpush.msra.mxu0 0.0
      %315 = vmatpush.msra.mxu0 %v286
      %316 = vmatpush.msra.mxu0 %v284
      %317 = vmatpush.msra.mxu0 %v282
      %318 = vmatpush.msra.mxu0 %v280
      %319 = vmatpush.msra.mxu0 %v278
      %320 = vmatpush.msra.mxu0 %v276
      %321 = vmatpush.msra.mxu0 %v274
      %322 = vmatpush.msra.mxu0 %v272
      %323 = vmatpush.msra.mxu0 %v270
      %324 = vmatpush.msra.mxu0 %v268
      %325 = vmatpush.msra.mxu0 %v266
      %326 = vmatpush.msra.mxu0 %v264
      %327 = vmatmul.f32.gmra.mxu0 %v289
      %v328 = vpop.f32.mrf.mxu0
      %v329 = vadd.f32 0.0, %v328
      %330 = vdwg.mxu0
      %v331 = vxor.u32 %v329, 2147483648
      %v332 = vmul.f32 %v331, 1.442695
      %v333 = vpow.pop %v332
      %v334 = vadd.f32 %v333, 1.0
      %v335 = vrcp.pop %v334
      %v336 = vmul.f32 %v334, %v335
      %v337 = vsub.f32 1.0, %v336
      %v338 = vmul.f32 %v335, %v337
      %v339 = vadd.f32 %v335, %v338
      %vm340 = vweird.f32 %v334
      %vm341 = vweird.f32 %v335
      %vm342 = vmor %vm340, %vm341
      %v343 = vsel %vm342, %v335, %v339
      %v344 = vand.u32 2147483647, %v334
      %vm345 = vcmp.eq.f32.partialorder %v344, 8.507059e+37
      %v346 = vand.u32 %v334, 2147483648
      %v347 = vor.u32 1.1754944e-38, %v346
      %v348 = vsel %vm345, %v347, %v343
      %v349 = vmul.f32 1.0, %v348
      %v350 = vxor.u32 %v309, 2147483648
      %v351 = vmul.f32 %v350, 1.442695
      %v352 = vpow.pop %v351
      %v353 = vadd.f32 %v352, 1.0
      %v354 = vrcp.pop %v353
      %v355 = vmul.f32 %v353, %v354
      %v356 = vsub.f32 1.0, %v355
      %v357 = vmul.f32 %v354, %v356
      %v358 = vadd.f32 %v354, %v357
      %vm359 = vweird.f32 %v353
      %vm360 = vweird.f32 %v354
      %vm361 = vmor %vm359, %vm360
      %v362 = vsel %vm361, %v354, %v358
      %v363 = vand.u32 2147483647, %v353
      %vm364 = vcmp.eq.f32.partialorder %v363, 8.507059e+37
      %v365 = vand.u32 %v353, 2147483648
      %v366 = vor.u32 1.1754944e-38, %v365
      %v367 = vsel %vm364, %v366, %v362
      %v368 = vmul.f32 1.0, %v367
      %370 = vrot.lane.b32.xlu0 %v349, 32
      %v371 = vpop.permute.xlu0 %370
      %v373 = vadd.f32 %v309, %v371
      %v374 = vxor.u32 %v373, 2147483648
      %v375 = vmul.f32 %v374, 1.442695
      %v376 = vpow.pop %v375
      %v377 = vadd.f32 %v376, 1.0
      %v378 = vrcp.pop %v377
      %v379 = vmul.f32 %v377, %v378
      %v380 = vsub.f32 1.0, %v379
      %v381 = vmul.f32 %v378, %v380
      %v382 = vadd.f32 %v378, %v381
      %vm383 = vweird.f32 %v377
      %vm384 = vweird.f32 %v378
      %vm385 = vmor %vm383, %vm384
      %v386 = vsel %vm385, %v378, %v382
      %v387 = vand.u32 2147483647, %v377
      %vm388 = vcmp.eq.f32.partialorder %v387, 8.507059e+37
      %v389 = vand.u32 %v377, 2147483648
      %v390 = vor.u32 1.1754944e-38, %v389
      %v391 = vsel %vm388, %v390, %v386
      %v392 = vmul.f32 1.0, %v391
      %v393 = vtanh.pop %v309
      %395 = vrot.lane.b32.xlu0 %v392, 64
      %v396 = vpop.permute.xlu0 %395
      %v398 = vmul.f32 %v368, %v396
      %400 = vrot.lane.b32.xlu0 %v393, 32
      %v401 = vpop.permute.xlu0 %400
      %v403 = vmul.f32 %v398, %v401
      %v404 = vmul.f32 %v368, %v254
      %406 = vrot.lane.b32.xlu0 %v404, 96
      %v407 = vpop.permute.xlu0 %406
      %v409 = vadd.f32 %v403, %v407
      %v410 = vtanh.pop %v409
      %v411 = vmul.f32 %v349, %v410
      %v412 = vld [vmem:[%s3] sm:$0xff]
      %v413 = vld [vmem:[%s3 + $0x8] sm:$0xff]
      %v414 = vld [vmem:[%s3 + $0x10] sm:$0xff]
      %v415 = vld [vmem:[%s3 + $0x18] sm:$0xff]
      %v416 = vld [vmem:[%s4] sm:$0x1]
      %v418 = vperm.slane %v416, 0
      %v421 = vsel %vm259, %v411, 0
      %423 = vmatpush.msra.mxu0 0.0
      %424 = vmatpush.msra.mxu0 0.0
      %425 = vmatpush.msra.mxu0 0.0
      %426 = vmatpush.msra.mxu0 0.0
      %427 = vmatpush.msra.mxu0 0.0
      %428 = vmatpush.msra.mxu0 0.0
      %429 = vmatpush.msra.mxu0 0.0
      %430 = vmatpush.msra.mxu0 0.0
      %431 = vmatpush.msra.mxu0 0.0
      %432 = vmatpush.msra.mxu0 0.0
      %433 = vmatpush.msra.mxu0 0.0
      %434 = vmatpush.msra.mxu0 0.0
      %435 = vmatpush.msra.mxu0 %v415
      %436 = vmatpush.msra.mxu0 %v414
      %437 = vmatpush.msra.mxu0 %v413
      %438 = vmatpush.msra.mxu0 %v412
      %439 = vmatmul.f32.gmra.mxu0 %v421
      %v440 = vpop.f32.mrf.mxu0
      %v441 = vadd.f32 %v418, %v440
      %442 = vdwg.mxu0
      %v443 = vxor.u32 %v441, 2147483648
      %v444 = vmul.f32 %v443, 1.442695
      %v445 = vpow.pop %v444
      %v446 = vadd.f32 %v445, 1.0
      %v447 = vrcp.pop %v446
      %v448 = vmul.f32 %v446, %v447
      %v449 = vsub.f32 1.0, %v448
      %v450 = vmul.f32 %v447, %v449
      %v451 = vadd.f32 %v447, %v450
      %vm452 = vweird.f32 %v446
      %vm453 = vweird.f32 %v447
      %vm454 = vmor %vm452, %vm453
      %v455 = vsel %vm454, %v447, %v451
      %v456 = vand.u32 2147483647, %v446
      %vm457 = vcmp.eq.f32.partialorder %v456, 8.507059e+37
      %v458 = vand.u32 %v446, 2147483648
      %v459 = vor.u32 1.1754944e-38, %v458
      %v460 = vsel %vm457, %v459, %v455
      %v461 = vmul.f32 1.0, %v460
      %462 = vrot.lane.b32.xlu0 %v254, 96
      %v463 = vpop.permute.xlu0 %462
      %466 = vrot.lane.b32.xlu0 %v461, 96
      %v467 = vpop.permute.xlu0 %466
      %v469 = vsel %vm259, %v253, %v463
      %v470 = vsel %vm261, %v469, %v463
      %v471 = vsel %vm287, %v470, %v467
      %v472 = vld [vmem:[%s5] sm:$0xff]
      %v473 = vld [vmem:[%s5 + $0x8] sm:$0xff]
      %v474 = vld [vmem:[%s5 + $0x10] sm:$0xff]
      %v475 = vld [vmem:[%s5 + $0x18] sm:$0xff]
      %v476 = vld [vmem:[%s5 + $0x20] sm:$0xff]
      %v477 = vld [vmem:[%s5 + $0x28] sm:$0xff]
      %v478 = vld [vmem:[%s5 + $0x30] sm:$0xff]
      %v479 = vld [vmem:[%s5 + $0x38] sm:$0xff]
      %v480 = vld [vmem:[%s5 + $0x40] sm:$0xff]
      %v481 = vld [vmem:[%s5 + $0x48] sm:$0xff]
      %v482 = vld [vmem:[%s5 + $0x50] sm:$0xff]
      %v483 = vld [vmem:[%s5 + $0x58] sm:$0xff]
      %v484 = vld [vmem:[%s5 + $0x60] sm:$0xff]
      %v485 = vld [vmem:[%s5 + $0x68] sm:$0xff]
      %v486 = vld [vmem:[%s5 + $0x70] sm:$0xff]
      %v487 = vld [vmem:[%s5 + $0x78] sm:$0xff]
      %v488 = vld [vmem:[%s5 + $0x80] sm:$0xff]
      %v489 = vld [vmem:[%s5 + $0x88] sm:$0xff]
      %v490 = vld [vmem:[%s5 + $0x90] sm:$0xff]
      %v491 = vld [vmem:[%s5 + $0x98] sm:$0xff]
      %v492 = vld [vmem:[%s5 + $0xa0] sm:$0xff]
      %v493 = vld [vmem:[%s5 + $0xa8] sm:$0xff]
      %v494 = vld [vmem:[%s5 + $0xb0] sm:$0xff]
      %v495 = vld [vmem:[%s5 + $0xb8] sm:$0xff]
      %v496 = vld [vmem:[%s5 + $0xc0] sm:$0xff]
      %v497 = vld [vmem:[%s5 + $0xc8] sm:$0xff]
      %v498 = vld [vmem:[%s5 + $0xd0] sm:$0xff]
      %v499 = vld [vmem:[%s5 + $0xd8] sm:$0xff]
      %v500 = vld [vmem:[%s5 + $0xe0] sm:$0xff]
      %v501 = vld [vmem:[%s5 + $0xe8] sm:$0xff]
      %v502 = vld [vmem:[%s5 + $0xf0] sm:$0xff]
      %v503 = vld [vmem:[%s5 + $0xf8] sm:$0xff]
      %504 = vmatpush.msra.mxu0 %v502
      %505 = vmatpush.msra.mxu0 %v500
      %506 = vmatpush.msra.mxu0 %v498
      %507 = vmatpush.msra.mxu0 %v496
      %508 = vmatpush.msra.mxu0 %v494
      %509 = vmatpush.msra.mxu0 %v492
      %510 = vmatpush.msra.mxu0 %v490
      %511 = vmatpush.msra.mxu0 %v488
      %512 = vmatpush.msra.mxu0 %v486
      %513 = vmatpush.msra.mxu0 %v484
      %514 = vmatpush.msra.mxu0 %v482
      %515 = vmatpush.msra.mxu0 %v480
      %516 = vmatpush.msra.mxu0 %v478
      %517 = vmatpush.msra.mxu0 %v476
      %518 = vmatpush.msra.mxu0 %v474
      %519 = vmatpush.msra.mxu0 %v472
      %520 = vmatmul.f32.gmra.mxu0 %v471
      %v521 = vpop.f32.mrf.mxu0
      %v522 = vadd.f32 0.0, %v521
      %523 = vdwg.mxu0
      %524 = vmatpush.msra.mxu0 %v503
      %525 = vmatpush.msra.mxu0 %v501
      %526 = vmatpush.msra.mxu0 %v499
      %527 = vmatpush.msra.mxu0 %v497
      %528 = vmatpush.msra.mxu0 %v495
      %529 = vmatpush.msra.mxu0 %v493
      %530 = vmatpush.msra.mxu0 %v491
      %531 = vmatpush.msra.mxu0 %v489
      %532 = vmatpush.msra.mxu0 %v487
      %533 = vmatpush.msra.mxu0 %v485
      %534 = vmatpush.msra.mxu0 %v483
      %535 = vmatpush.msra.mxu0 %v481
      %536 = vmatpush.msra.mxu0 %v479
      %537 = vmatpush.msra.mxu0 %v477
      %538 = vmatpush.msra.mxu0 %v475
      %539 = vmatpush.msra.mxu0 %v473
      %540 = vmatmul.f32.gmra.mxu0 %v471
      %v541 = vpop.f32.mrf.mxu0
      %v542 = vadd.f32 0.0, %v541
      %543 = vdwg.mxu0
      %v544 = vxor.u32 %v522, 2147483648
      %v545 = vmul.f32 %v544, 1.442695
      %v546 = vpow.pop %v545
      %v547 = vadd.f32 %v546, 1.0
      %v548 = vrcp.pop %v547
      %v549 = vmul.f32 %v547, %v548
      %v550 = vsub.f32 1.0, %v549
      %v551 = vmul.f32 %v548, %v550
      %v552 = vadd.f32 %v548, %v551
      %vm553 = vweird.f32 %v547
      %vm554 = vweird.f32 %v548
      %vm555 = vmor %vm553, %vm554
      %v556 = vsel %vm555, %v548, %v552
      %v557 = vand.u32 2147483647, %v547
      %vm558 = vcmp.eq.f32.partialorder %v557, 8.507059e+37
      %v559 = vand.u32 %v547, 2147483648
      %v560 = vor.u32 1.1754944e-38, %v559
      %v561 = vsel %vm558, %v560, %v556
      %v562 = vmul.f32 1.0, %v561
      %v563 = vadd.f32 %v522, %v349
      %v564 = vxor.u32 %v563, 2147483648
      %v565 = vmul.f32 %v564, 1.442695
      %v566 = vpow.pop %v565
      %v567 = vadd.f32 %v566, 1.0
      %v568 = vrcp.pop %v567
      %v569 = vmul.f32 %v567, %v568
      %v570 = vsub.f32 1.0, %v569
      %v571 = vmul.f32 %v568, %v570
      %v572 = vadd.f32 %v568, %v571
      %vm573 = vweird.f32 %v567
      %vm574 = vweird.f32 %v568
      %vm575 = vmor %vm573, %vm574
      %v576 = vsel %vm575, %v568, %v572
      %v577 = vand.u32 2147483647, %v567
      %vm578 = vcmp.eq.f32.partialorder %v577, 8.507059e+37
      %v579 = vand.u32 %v567, 2147483648
      %v580 = vor.u32 1.1754944e-38, %v579
      %v581 = vsel %vm578, %v580, %v576
      %v582 = vmul.f32 1.0, %v581
      %v583 = vtanh.pop %v522
      %v584 = vxor.u32 %v542, 2147483648
      %v585 = vmul.f32 %v584, 1.442695
      %v586 = vpow.pop %v585
      %v587 = vadd.f32 %v586, 1.0
      %v588 = vrcp.pop %v587
      %v589 = vmul.f32 %v587, %v588
      %v590 = vsub.f32 1.0, %v589
      %v591 = vmul.f32 %v588, %v590
      %v592 = vadd.f32 %v588, %v591
      %vm593 = vweird.f32 %v587
      %vm594 = vweird.f32 %v588
      %vm595 = vmor %vm593, %vm594
      %v596 = vsel %vm595, %v588, %v592
      %v597 = vand.u32 2147483647, %v587
      %vm598 = vcmp.eq.f32.partialorder %v597, 8.507059e+37
      %v599 = vand.u32 %v587, 2147483648
      %v600 = vor.u32 1.1754944e-38, %v599
      %v601 = vsel %vm598, %v600, %v596
      %v602 = vmul.f32 1.0, %v601
      %604 = vrot.lane.b32.xlu0 %v582, 64
      %v605 = vpop.permute.xlu0 %604
      %v607 = vmul.f32 %v562, %v605
      %609 = vrot.lane.b32.xlu0 %v583, 32
      %v610 = vpop.permute.xlu0 %609
      %v612 = vmul.f32 %v607, %v610
      %613 = vrot.lane.b32.xlu0 %v254, 64
      %v614 = vpop.permute.xlu0 %613
      %v616 = vmul.f32 %v562, %v614
      %618 = vrot.lane.b32.xlu0 %v616, 96
      %v619 = vpop.permute.xlu0 %618
      %v621 = vadd.f32 %v612, %v619
      %v622 = vtanh.pop %v621
      %v623 = vmul.f32 %v602, %v622
      %625 = vrot.lane.b32.xlu0 %v409, 32
      %v626 = vpop.permute.xlu0 %625
      %629 = vrot.lane.b32.xlu0 %v623, 64
      %v630 = vpop.permute.xlu0 %629
      %633 = vrot.lane.b32.xlu0 %v621, 96
      %v634 = vpop.permute.xlu0 %633
      %v636 = vsel %vm259, %v411, %v626
      %v637 = vsel %vm261, %v636, %v630
      %v638 = vsel %vm287, %v637, %v634
      %639 = vst [vmem:[#allocation2] sm:$0xff] %v638
      %640 = vst [vmem:[%s246] sm:$0xff] %v638
      %p641 = scmp.lt.s32.totalorder %s17, 7
      %s642 = scalar_select %p641, %s17, 7
      %s643 = smul.addr %s642, 8
      %s644 = scalar_lea.vmem %s6, %s643
      // Predicated region
      $region49: #{time_lstm_seq.1} parent=43 // pred_check
        %p645 = pneg %p166
      $region50: #{time_lstm_seq.1} parent=43 // pred_check_branch
        %647 = sbr.rel (%p645) target = $region52
      $region51: #{time_lstm_seq.1} parent=43 // pred_region
        _
      $region52: #{time_lstm_seq.1} parent=43 // pred_fallthru
        _
    $region44: #{time_lstm_seq.1} parent=5 // pred_fallthru
      _
    %p648 = scmp.le.s32.totalorder 2, %s12
    // Predicated region
    $region53: #{time_lstm_seq.1} parent=5 // pred_check
      %p649 = pneg %p648
    $region54: #{time_lstm_seq.1} parent=5 // pred_check_branch
      %651 = sbr.rel (%p649) target = $region56
    $region55: #{time_lstm_seq.1} parent=5 // pred_region
      %s652 = ssub.s32 %s12, 2
      // Predicated region
      $region57: #{time_lstm_seq.1} parent=55 // pred_check
        %p653 = pneg %p172
      $region58: #{time_lstm_seq.1} parent=55 // pred_check_branch
        %655 = sbr.rel (%p653) target = $region60
      $region59: #{time_lstm_seq.1} parent=55 // pred_region
        %p656 = scmp.lt.s32.totalorder %s18, 7
        %s657 = scalar_select %p656, %s18, 7
        %s658 = smul.addr %s657, 8
        %s659 = scalar_lea.vmem %s6, %s658
      $region60: #{time_lstm_seq.1} parent=55 // pred_fallthru
        _
    $region56: #{time_lstm_seq.1} parent=5 // pred_fallthru
      _
  $region6: #{time_lstm_seq.1} parent=0 // loop_footer
    %s16 = sadd.s32 1, %s12
  $region7: #{time_lstm_seq.1} parent=0 // loop_footer_branch
    %11 = sbr.rel target = $region3
  $region8: #{time_lstm_seq.1} parent=0 // loop_exit
    _

</llo_original>
